<compile_context>
chip_gen: v7x
topology: tpu7x:2x2x1
jax: 0.10.0
libtpu: 0.0.40
codegen_flags: <defaults>
</compile_context>

<pallas_src>
import functools

import jax
import jax.numpy as jnp
from jax import lax
from jax.experimental import pallas as pl
from jax.experimental.pallas import tpu as pltpu


# ----------------------------------------------------------------------------
# Pallas kernel: fused conv + gated-conv + sigmoid gating for one image.
# ----------------------------------------------------------------------------
def _make_gated_conv_kernel(C_in, C_out, KH, KW, W_pad, P):
    def kernel(x_ref, w_ref, b_ref, o_ref, patch_ref):
        # x_ref     : (C_in, Lp)     flat zero-padded image, spatial on lanes
        # w_ref     : (2*C_out, K)   fused conv||gate weights (resident)
        # b_ref     : (2*C_out, 1)   fused biases
        # o_ref     : (C_out, P)     lane-dense dense-stride-1 output
        # patch_ref : (K, P) VMEM    im2col slab (9 lane-offset copies)
        x = x_ref[...]
        for kh in range(KH):
            for kw in range(KW):
                t = kh * KW + kw
                off = kh * W_pad + kw          # static lane offset of this tap
                patch_ref[t * C_in:(t + 1) * C_in, :] = x[:, off:off + P]
        # One fused MXU matmul for both branches: (2*C_out, K) @ (K, P).
        y = jnp.dot(w_ref[...], patch_ref[...],
                    preferred_element_type=jnp.float32) + b_ref[...]
        a = y[:C_out]            # conv branch   (sublane slice, 8-aligned)
        g = y[C_out:]            # gate branch
        o_ref[...] = (a * jax.nn.sigmoid(g)).astype(o_ref.dtype)

    return kernel


@functools.partial(jax.jit, static_argnames=("kernel_size", "padding", "stride"))
def gated_cnn_forward(x, wa, ba, wg, bg, *, kernel_size, padding, stride):
    """GatedCNN forward. x: (N, C_in, H, W) NCHW. Returns (N, C_out, H_out, W_out)."""
    N, C_in, H, W = x.shape
    C_out = wa.shape[0]
    KH = KW = kernel_size
    H_out = (H + 2 * padding - KH) // stride + 1
    W_out = (W + 2 * padding - KW) // stride + 1
    H_pad, W_pad = H + 2 * padding, W + 2 * padding

    # Dense stride-1 geometry computed by the kernel (stride applied afterwards
    # as a cheap subsample — the demo uses stride=1, so nothing extra happens).
    H_dense = H_pad - KH + 1
    P = H_dense * W_pad                    # dense flat output columns / image
    K = KH * KW * C_in                     # fused contraction length (36)

    # Zero-pad spatially + ONE extra zero row at the bottom so every tap's
    # flat window [off_t, off_t + P) stays in bounds
    # (max need = H_pad*W_pad + KW - 1 <= (H_pad+1)*W_pad).  NCHW kept: no
    # transpose; the trailing-dims flatten is free in HBM.
    x_pad = jnp.pad(
        x, ((0, 0), (0, 0), (padding, padding + 1), (padding, padding)))
    Lp = (H_pad + 1) * W_pad
    x_flat = x_pad.reshape(N, C_in, Lp)

    # Fuse the two conv branches into one (2*C_out, K) weight tile whose column
    # order (kh, kw, c) matches the patch-slab row order t*C_in + c.
    w_cat = jnp.concatenate([wa, wg], axis=0)            # (2*C_out, C_in, KH, KW)
    w2 = jnp.transpose(w_cat, (0, 2, 3, 1)).reshape(2 * C_out, K)
    b2 = jnp.concatenate([ba, bg], axis=0).reshape(2 * C_out, 1)

    kernel = _make_gated_conv_kernel(C_in, C_out, KH, KW, W_pad, P)

    out = pl.pallas_call(
        kernel,
        out_shape=jax.ShapeDtypeStruct((N, C_out, P), x.dtype),
        grid_spec=pltpu.PrefetchScalarGridSpec(
            num_scalar_prefetch=0,
            grid=(N,),                       # one image per step, megacore-parallel
            in_specs=[
                # flat padded image: last two dims are full extents (C_in, Lp)
                pl.BlockSpec((None, C_in, Lp), lambda n: (n, 0, 0)),
                # fused weights / biases stay resident across the grid
                pl.BlockSpec((2 * C_out, K), lambda n: (0, 0)),
                pl.BlockSpec((2 * C_out, 1), lambda n: (0, 0)),
            ],
            # lane-dense output block: spatial (P) on the lane axis
            out_specs=pl.BlockSpec((None, C_out, P), lambda n: (n, 0, 0)),
            scratch_shapes=[pltpu.VMEM((K, P), jnp.float32)],
        ),
        compiler_params=pltpu.CompilerParams(
            dimension_semantics=("parallel",)),
    )(x_flat, w2, b2)

    # Dense (C_out, H_dense, W_pad) -> drop the KW-1 straddle columns per row
    # and apply the stride.  Trailing-dim reshape is free; the slice is tiny.
    out = out.reshape(N, C_out, H_dense, W_pad)
    out = out[:, :,
              0:(H_out - 1) * stride + 1:stride,
              0:(W_out - 1) * stride + 1:stride]
    return out


# ----------------------------------------------------------------------------
# Pure-JAX reference (lax conv) for correctness checking.
# ----------------------------------------------------------------------------
def _ref_forward(x, wa, ba, wg, bg, *, padding, stride):
    dn = lax.conv_dimension_numbers(x.shape, wa.shape, ("NCHW", "OIHW", "NCHW"))

    def conv(w, b):
        y = lax.conv_general_dilated(
            x, w, window_strides=(stride, stride),
            padding=((padding, padding), (padding, padding)),
            dimension_numbers=dn)
        return y + b.reshape(1, -1, 1, 1)

    a = conv(wa, ba)
    b = conv(wg, bg)
    return a * jax.nn.sigmoid(b)


if __name__ == "__main__":
    # Small, deterministic setup consistent with the module's __init__.
    N, C_in, H, W = 2, 4, 16, 16
    C_out, ksize, pad, stride = 8, 3, 1, 1

    key = jax.random.PRNGKey(0)
    kx, kwa, kwg = jax.random.split(key, 3)

    x = jax.random.normal(kx, (N, C_in, H, W), dtype=jnp.float32)

    # kaiming_normal(mode='fan_out'): std = sqrt(2 / (C_out * KH * KW)); bias = 0.
    fan_out = C_out * ksize * ksize
    std = (2.0 / fan_out) ** 0.5
    wa = std * jax.random.normal(kwa, (C_out, C_in, ksize, ksize), dtype=jnp.float32)
    wg = std * jax.random.normal(kwg, (C_out, C_in, ksize, ksize), dtype=jnp.float32)
    ba = jnp.zeros((C_out,), dtype=jnp.float32)
    bg = jnp.zeros((C_out,), dtype=jnp.float32)

    out = gated_cnn_forward(x, wa, ba, wg, bg,
                            kernel_size=ksize, padding=pad, stride=stride)
    out = jax.block_until_ready(out)

    ref = _ref_forward(x, wa, ba, wg, bg, padding=pad, stride=stride)
    assert out.shape == (N, C_out, H, W), out.shape
    assert jnp.allclose(out, ref, atol=1e-5, rtol=1e-5), float(
        jnp.max(jnp.abs(out - ref)))

    print("KERNEL_OK")
</pallas_src>

<mosaic_0001>
module attributes {stable_mosaic.version = 11 : i64} {
  func.func @kernel(%arg0: i32, %arg1: memref<1x4x342xf32, #tpu.memory_space<vmem>>, %arg2: memref<16x36xf32, #tpu.memory_space<vmem>>, %arg3: memref<16x1xf32, #tpu.memory_space<vmem>>, %arg4: memref<1x8x288xf32, #tpu.memory_space<vmem>>, %arg5: memref<36x288xf32, #tpu.memory_space<vmem>>) attributes {dimension_semantics = [#tpu.dimension_semantics<parallel>], iteration_bounds = array<i64: 2>, scalar_prefetch = 0 : i64, scratch_operands = 1 : i64, tpu.core_type = #tpu.core_type<tc>, window_params = [{transform_indices = @transform_0, window_bounds = array<i64: 1, 4, 342>}, {pipeline_mode = #tpu.pipeline_mode<synchronous>, transform_indices = @transform_1, window_bounds = array<i64: 16, 36>}, {pipeline_mode = #tpu.pipeline_mode<synchronous>, transform_indices = @transform_2, window_bounds = array<i64: 16, 1>}, {transform_indices = @transform_3, window_bounds = array<i64: 1, 8, 288>}]} {
    %c0 = arith.constant 0 : index
    %c0_0 = arith.constant 0 : index
    %c0_1 = arith.constant 0 : index
    %0 = vector.load %arg1[%c0, %c0_0, %c0_1] : memref<1x4x342xf32, #tpu.memory_space<vmem>>, vector<1x4x342xf32>
    %1 = vector.shape_cast %0 : vector<1x4x342xf32> to vector<4x342xf32>
    %2 = vector.extract_strided_slice %1 {offsets = [0, 0], sizes = [4, 288], strides = [1, 1]} : vector<4x342xf32> to vector<4x288xf32>
    %c0_2 = arith.constant 0 : index
    %c0_3 = arith.constant 0 : index
    %3 = vector.load %arg5[%c0_2, %c0_3] : memref<36x288xf32, #tpu.memory_space<vmem>>, vector<4x288xf32>
    tpu.vector_store %arg5[%c0_2, %c0_3], %2 {strides = array<i32>} : memref<36x288xf32, #tpu.memory_space<vmem>>, vector<4x288xf32>,
    %4 = vector.extract_strided_slice %1 {offsets = [0, 1], sizes = [4, 288], strides = [1, 1]} : vector<4x342xf32> to vector<4x288xf32>
    %c4 = arith.constant 4 : index
    %c0_4 = arith.constant 0 : index
    %5 = vector.load %arg5[%c4, %c0_4] : memref<36x288xf32, #tpu.memory_space<vmem>>, vector<4x288xf32>
    tpu.vector_store %arg5[%c4, %c0_4], %4 {strides = array<i32>} : memref<36x288xf32, #tpu.memory_space<vmem>>, vector<4x288xf32>,
    %6 = vector.extract_strided_slice %1 {offsets = [0, 2], sizes = [4, 288], strides = [1, 1]} : vector<4x342xf32> to vector<4x288xf32>
    %c8 = arith.constant 8 : index
    %c0_5 = arith.constant 0 : index
    %7 = vector.load %arg5[%c8, %c0_5] : memref<36x288xf32, #tpu.memory_space<vmem>>, vector<4x288xf32>
    tpu.vector_store %arg5[%c8, %c0_5], %6 {strides = array<i32>} : memref<36x288xf32, #tpu.memory_space<vmem>>, vector<4x288xf32>,
    %8 = vector.extract_strided_slice %1 {offsets = [0, 18], sizes = [4, 288], strides = [1, 1]} : vector<4x342xf32> to vector<4x288xf32>
    %c12 = arith.constant 12 : index
    %c0_6 = arith.constant 0 : index
    %9 = vector.load %arg5[%c12, %c0_6] : memref<36x288xf32, #tpu.memory_space<vmem>>, vector<4x288xf32>
    tpu.vector_store %arg5[%c12, %c0_6], %8 {strides = array<i32>} : memref<36x288xf32, #tpu.memory_space<vmem>>, vector<4x288xf32>,
    %10 = vector.extract_strided_slice %1 {offsets = [0, 19], sizes = [4, 288], strides = [1, 1]} : vector<4x342xf32> to vector<4x288xf32>
    %c16 = arith.constant 16 : index
    %c0_7 = arith.constant 0 : index
    %11 = vector.load %arg5[%c16, %c0_7] : memref<36x288xf32, #tpu.memory_space<vmem>>, vector<4x288xf32>
    tpu.vector_store %arg5[%c16, %c0_7], %10 {strides = array<i32>} : memref<36x288xf32, #tpu.memory_space<vmem>>, vector<4x288xf32>,
    %12 = vector.extract_strided_slice %1 {offsets = [0, 20], sizes = [4, 288], strides = [1, 1]} : vector<4x342xf32> to vector<4x288xf32>
    %c20 = arith.constant 20 : index
    %c0_8 = arith.constant 0 : index
    %13 = vector.load %arg5[%c20, %c0_8] : memref<36x288xf32, #tpu.memory_space<vmem>>, vector<4x288xf32>
    tpu.vector_store %arg5[%c20, %c0_8], %12 {strides = array<i32>} : memref<36x288xf32, #tpu.memory_space<vmem>>, vector<4x288xf32>,
    %14 = vector.extract_strided_slice %1 {offsets = [0, 36], sizes = [4, 288], strides = [1, 1]} : vector<4x342xf32> to vector<4x288xf32>
    %c24 = arith.constant 24 : index
    %c0_9 = arith.constant 0 : index
    %15 = vector.load %arg5[%c24, %c0_9] : memref<36x288xf32, #tpu.memory_space<vmem>>, vector<4x288xf32>
    tpu.vector_store %arg5[%c24, %c0_9], %14 {strides = array<i32>} : memref<36x288xf32, #tpu.memory_space<vmem>>, vector<4x288xf32>,
    %16 = vector.extract_strided_slice %1 {offsets = [0, 37], sizes = [4, 288], strides = [1, 1]} : vector<4x342xf32> to vector<4x288xf32>
    %c28 = arith.constant 28 : index
    %c0_10 = arith.constant 0 : index
    %17 = vector.load %arg5[%c28, %c0_10] : memref<36x288xf32, #tpu.memory_space<vmem>>, vector<4x288xf32>
    tpu.vector_store %arg5[%c28, %c0_10], %16 {strides = array<i32>} : memref<36x288xf32, #tpu.memory_space<vmem>>, vector<4x288xf32>,
    %18 = vector.extract_strided_slice %1 {offsets = [0, 38], sizes = [4, 288], strides = [1, 1]} : vector<4x342xf32> to vector<4x288xf32>
    %c32 = arith.constant 32 : index
    %c0_11 = arith.constant 0 : index
    %19 = vector.load %arg5[%c32, %c0_11] : memref<36x288xf32, #tpu.memory_space<vmem>>, vector<4x288xf32>
    tpu.vector_store %arg5[%c32, %c0_11], %18 {strides = array<i32>} : memref<36x288xf32, #tpu.memory_space<vmem>>, vector<4x288xf32>,
    %c0_12 = arith.constant 0 : index
    %c0_13 = arith.constant 0 : index
    %20 = vector.load %arg2[%c0_12, %c0_13] : memref<16x36xf32, #tpu.memory_space<vmem>>, vector<16x36xf32>
    %c0_14 = arith.constant 0 : index
    %c0_15 = arith.constant 0 : index
    %21 = vector.load %arg5[%c0_14, %c0_15] : memref<36x288xf32, #tpu.memory_space<vmem>>, vector<36x288xf32>
    %cst = arith.constant dense<0.000000e+00> : vector<16x288xf32>
    %22 = tpu.matmul %20, %21, %cst {dimension_numbers = #tpu.dot_dimension_numbers<[1], [0], [0], [1], [0, 0, 1, 1], [], []>} : vector<16x36xf32>, vector<36x288xf32>, vector<16x288xf32> -> vector<16x288xf32>
    %c0_16 = arith.constant 0 : index
    %c0_17 = arith.constant 0 : index
    %23 = vector.load %arg3[%c0_16, %c0_17] : memref<16x1xf32, #tpu.memory_space<vmem>>, vector<16x1xf32>
    %24 = vector.broadcast %23 : vector<16x1xf32> to vector<16x288xf32>
    %25 = arith.addf %22, %24 : vector<16x288xf32>
    %26 = vector.extract_strided_slice %25 {offsets = [0, 0], sizes = [8, 288], strides = [1, 1]} : vector<16x288xf32> to vector<8x288xf32>
    %27 = vector.extract_strided_slice %25 {offsets = [8, 0], sizes = [8, 288], strides = [1, 1]} : vector<16x288xf32> to vector<8x288xf32>
    %28 = arith.negf %27 : vector<8x288xf32>
    %29 = math.exp %28 : vector<8x288xf32>
    %cst_18 = arith.constant 1.000000e+00 : f32
    %30 = vector.broadcast %cst_18 : f32 to vector<8x288xf32>
    %31 = arith.addf %30, %29 : vector<8x288xf32>
    %32 = arith.divf %30, %31 : vector<8x288xf32>
    %33 = arith.mulf %26, %32 : vector<8x288xf32>
    %c0_19 = arith.constant 0 : index
    %c0_20 = arith.constant 0 : index
    %c0_21 = arith.constant 0 : index
    %34 = vector.load %arg4[%c0_19, %c0_20, %c0_21] : memref<1x8x288xf32, #tpu.memory_space<vmem>>, vector<1x8x288xf32>
    %35 = vector.shape_cast %34 : vector<1x8x288xf32> to vector<8x288xf32>
    %36 = vector.shape_cast %33 : vector<8x288xf32> to vector<1x8x288xf32>
    tpu.vector_store %arg4[%c0_19, %c0_20, %c0_21], %36 {strides = array<i32>} : memref<1x8x288xf32, #tpu.memory_space<vmem>>, vector<1x8x288xf32>,
    return
  }
  func.func @transform_0(%arg0: i32) -> (i32, i32, i32) {
    %c0_i32 = arith.constant 0 : i32
    %c0_i32_0 = arith.constant 0 : i32
    %c0_i32_1 = arith.constant 0 : i32
    return %arg0, %c0_i32, %c0_i32_0 : i32, i32, i32
  }
  func.func @transform_1(%arg0: i32) -> (i32, i32) {
    %c0_i32 = arith.constant 0 : i32
    %c0_i32_0 = arith.constant 0 : i32
    %c0_i32_1 = arith.constant 0 : i32
    return %c0_i32, %c0_i32_0 : i32, i32
  }
  func.func @transform_2(%arg0: i32) -> (i32, i32) {
    %c0_i32 = arith.constant 0 : i32
    %c0_i32_0 = arith.constant 0 : i32
    %c0_i32_1 = arith.constant 0 : i32
    return %c0_i32, %c0_i32_0 : i32, i32
  }
  func.func @transform_3(%arg0: i32) -> (i32, i32, i32) {
    %c0_i32 = arith.constant 0 : i32
    %c0_i32_0 = arith.constant 0 : i32
    %c0_i32_1 = arith.constant 0 : i32
    return %arg0, %c0_i32, %c0_i32_0 : i32, i32, i32
  }
}

</mosaic_0001>

<llo_original>
// kernel: gated_cnn_forward.1
$region0: #{gated_cnn_forward.1}
  #allocation0 [shape = 'u32[]', space=smem, size = 0x4, offset = 0x4, fixed_abs, tag = 'smem constant byte address 0x4 - core index']
  #allocation1 [shape = 'u32[144,128]{1,0:T(1,128)}', space=vmem, size = 0x12000, scoped, tag = 'internal scratch']
  #allocation2 [shape = 'f32[36,288]{1,0:T(8,128)}', space=vmem, size = 0xf000, scoped, tag = 'scratch operand']
  %s0 = inlined_call_operand.vmem [shape: f32[2,4,342], index: 0, kind: input, shape index: {}]
  %s1 = inlined_call_operand.vmem [shape: f32[16,36], index: 1, kind: input, shape index: {}]
  %s2 = inlined_call_operand.vmem [shape: f32[16,1], index: 2, kind: input, shape index: {}]
  %s3 = inlined_call_operand.vmem [shape: f32[2,8,288], index: 3, kind: output, shape index: {}]
  %s4 = sld [smem:[#allocation0]]
  $region45: #{gated_cnn_forward.1} parent=0
    _
  %s6 = ssub.s32 1, %s4
  %s7 = scalar_select 0, %s6, %s4
  loop: start=0, step=1, limit=4
  $region2: #{gated_cnn_forward.1} parent=0 // loop_pre_header
    _
  $region3: #{gated_cnn_forward.1} parent=0 // loop_header
    %s9 = sphi 0, %s13
    %p10 = scmp.ge.s32.totalorder %s9, 4
    %s19 = sphi 0, %s21
    %s22 = sphi 0, %s19
    %s23 = sphi 0, %s22
    %s39 = sphi 0, %s23
    %s43 = sphi 0, %s43
    %s45 = sphi 0, %s43
    %s46 = sphi 0, %s45
    %s60 = sphi 0, %s46
    %s64 = sphi 0, %s64
    %s66 = sphi 0, %s64
    %s67 = sphi 0, %s66
    %s81 = sphi 0, %s67
    %s87 = sphi 0, %s89
    %s90 = sphi 0, %s87
    %s91 = sphi 0, %s90
    %s107 = sphi 0, %s91
  $region4: #{gated_cnn_forward.1} parent=0 // loop_header_branch
    %12 = sbr.rel (%p10) target = $region8
  $region5: #{gated_cnn_forward.1} parent=0 // loop_body
    %s14 = ssub.s32 %s9, 1
    %s15 = ssub.s32 %s9, 2
    %s16 = sadd.s32 %s9, 1
    %s17 = ssub.s32 %s9, %s16
    %p18 = scmp.eq.s32.totalorder %s17, 0
    %s20 = sadd.s32 %s19, 1
    %s21 = scalar_select %p18, %s19, %s20
    %p24 = pneg %p18
    %p25 = scmp.eq.s32.totalorder %s9, 1
    %p26 = por %p24, %p25
    %p27 = scmp.ne.s32.totalorder %s19, %s22
    %p28 = scmp.eq.s32.totalorder %s9, 0
    %p29 = por %p27, %p28
    %p30 = scmp.ne.s32.totalorder %s19, %s22
    %p31 = scmp.eq.s32.totalorder %s14, 1
    %p32 = por %p30, %p31
    %p33 = scmp.ne.s32.totalorder %s22, %s23
    %p34 = scmp.eq.s32.totalorder %s14, 0
    %p35 = por %p33, %p34
    %p36 = scmp.ne.s32.totalorder %s22, %s23
    %p37 = scmp.eq.s32.totalorder %s15, 1
    %p38 = por %p36, %p37
    %p40 = scmp.ne.s32.totalorder %s23, %s39
    %p41 = scmp.eq.s32.totalorder %s15, 0
    %p42 = por %p40, %p41
    %s44 = sadd.s32 %s43, 1
    %p47 = scmp.eq.s32.totalorder %s9, 1
    %p48 = scmp.ne.s32.totalorder %s43, %s45
    %p49 = scmp.eq.s32.totalorder %s9, 0
    %p50 = por %p48, %p49
    %p51 = scmp.ne.s32.totalorder %s43, %s45
    %p52 = scmp.eq.s32.totalorder %s14, 1
    %p53 = por %p51, %p52
    %p54 = scmp.ne.s32.totalorder %s45, %s46
    %p55 = scmp.eq.s32.totalorder %s14, 0
    %p56 = por %p54, %p55
    %p57 = scmp.ne.s32.totalorder %s45, %s46
    %p58 = scmp.eq.s32.totalorder %s15, 1
    %p59 = por %p57, %p58
    %p61 = scmp.ne.s32.totalorder %s46, %s60
    %p62 = scmp.eq.s32.totalorder %s15, 0
    %p63 = por %p61, %p62
    %s65 = sadd.s32 %s64, 1
    %p68 = scmp.eq.s32.totalorder %s9, 1
    %p69 = scmp.ne.s32.totalorder %s64, %s66
    %p70 = scmp.eq.s32.totalorder %s9, 0
    %p71 = por %p69, %p70
    %p72 = scmp.ne.s32.totalorder %s64, %s66
    %p73 = scmp.eq.s32.totalorder %s14, 1
    %p74 = por %p72, %p73
    %p75 = scmp.ne.s32.totalorder %s66, %s67
    %p76 = scmp.eq.s32.totalorder %s14, 0
    %p77 = por %p75, %p76
    %p78 = scmp.ne.s32.totalorder %s66, %s67
    %p79 = scmp.eq.s32.totalorder %s15, 1
    %p80 = por %p78, %p79
    %p82 = scmp.ne.s32.totalorder %s67, %s81
    %p83 = scmp.eq.s32.totalorder %s15, 0
    %p84 = por %p82, %p83
    %s85 = ssub.s32 %s9, %s16
    %p86 = scmp.eq.s32.totalorder %s85, 0
    %s88 = sadd.s32 %s87, 1
    %s89 = scalar_select %p86, %s87, %s88
    %p92 = pneg %p86
    %p93 = scmp.eq.s32.totalorder %s9, 1
    %p94 = por %p92, %p93
    %p95 = scmp.ne.s32.totalorder %s87, %s90
    %p96 = scmp.eq.s32.totalorder %s9, 0
    %p97 = por %p95, %p96
    %p98 = scmp.ne.s32.totalorder %s87, %s90
    %p99 = scmp.eq.s32.totalorder %s14, 1
    %p100 = por %p98, %p99
    %p101 = scmp.ne.s32.totalorder %s90, %s91
    %p102 = scmp.eq.s32.totalorder %s14, 0
    %p103 = por %p101, %p102
    %p104 = scmp.ne.s32.totalorder %s90, %s91
    %p105 = scmp.eq.s32.totalorder %s15, 1
    %p106 = por %p104, %p105
    %p108 = scmp.ne.s32.totalorder %s91, %s107
    %p109 = scmp.eq.s32.totalorder %s15, 0
    %p110 = por %p108, %p109
    %p111 = scmp.le.s32.totalorder 1, %s9
    %p112 = scmp.lt.s32.totalorder %s9, 3
    %p113 = pnand %p111, %p112
    %p114 = pneg %p113
    // Predicated region
    $region9: #{gated_cnn_forward.1} parent=5 // pred_check
      _
    $region10: #{gated_cnn_forward.1} parent=5 // pred_check_branch
      %116 = sbr.rel (%p113) target = $region12
    $region11: #{gated_cnn_forward.1} parent=5 // pred_region
      %s117 = ssub.s32 %s9, 1
      // Predicated region
      $region13: #{gated_cnn_forward.1} parent=11 // pred_check
        %p118 = pneg %p56
      $region14: #{gated_cnn_forward.1} parent=11 // pred_check_branch
        %120 = sbr.rel (%p118) target = $region16
      $region15: #{gated_cnn_forward.1} parent=11 // pred_region
        _
      $region16: #{gated_cnn_forward.1} parent=11 // pred_fallthru
        _
      // Predicated region
      $region17: #{gated_cnn_forward.1} parent=11 // pred_check
        %p121 = pneg %p77
      $region18: #{gated_cnn_forward.1} parent=11 // pred_check_branch
        %123 = sbr.rel (%p121) target = $region20
      $region19: #{gated_cnn_forward.1} parent=11 // pred_region
        _
      $region20: #{gated_cnn_forward.1} parent=11 // pred_fallthru
        _
    $region12: #{gated_cnn_forward.1} parent=5 // pred_fallthru
      _
    %p124 = scmp.lt.s32.totalorder %s9, 2
    // Predicated region
    $region21: #{gated_cnn_forward.1} parent=5 // pred_check
      %p125 = pneg %p124
    $region22: #{gated_cnn_forward.1} parent=5 // pred_check_branch
      %127 = sbr.rel (%p125) target = $region24
    $region23: #{gated_cnn_forward.1} parent=5 // pred_region
      // Predicated region
      $region25: #{gated_cnn_forward.1} parent=23 // pred_check
        %p128 = pneg %p29
      $region26: #{gated_cnn_forward.1} parent=23 // pred_check_branch
        %130 = sbr.rel (%p128) target = $region28
      $region27: #{gated_cnn_forward.1} parent=23 // pred_region
        %p131 = scmp.lt.s32.totalorder %s9, 1
        %s132 = scalar_select %p131, %s9, 1
        %s133 = smul.addr %s132, 3
        %s134 = smul.addr %s133, 4
        %s135 = scalar_lea.vmem %s0, %s134
      $region28: #{gated_cnn_forward.1} parent=23 // pred_fallthru
        _
    $region24: #{gated_cnn_forward.1} parent=5 // pred_fallthru
      _
    %p136 = scmp.le.s32.totalorder 1, %s9
    %p137 = scmp.lt.s32.totalorder %s9, 3
    %p138 = pnand %p136, %p137
    %p139 = pneg %p138
    // Predicated region
    $region29: #{gated_cnn_forward.1} parent=5 // pred_check
      _
    $region30: #{gated_cnn_forward.1} parent=5 // pred_check_branch
      %141 = sbr.rel (%p138) target = $region32
    $region31: #{gated_cnn_forward.1} parent=5 // pred_region
      %s142 = ssub.s32 %s9, 1
      %p143 = scmp.lt.s32.totalorder %s14, 1
      %s144 = scalar_select %p143, %s14, 1
      %s145 = smul.addr %s144, 3
      %s146 = smul.addr %s145, 4
      %s147 = scalar_lea.vmem %s0, %s146
      %p148 = pneg %p35
      %p149 = pneg %p32
      %p150 = pneg %p56
      %p151 = pneg %p53
      %p152 = pneg %p77
      %p153 = pneg %p74
      %p154 = pneg %p103
      %p155 = pneg %p100
      %p156 = scmp.lt.s32.totalorder %s14, 1
      %s157 = scalar_select %p156, %s14, 1
      %s158 = smul.addr %s157, 3
      %s159 = smul.addr %s158, 8
      %s160 = scalar_lea.vmem %s3, %s159
      %p161 = scmp.lt.s32.totalorder %s14, 1
      %s162 = scalar_select %p161, %s14, 1
      %s163 = smul.addr %s162, 3
      %s164 = smul.addr %s163, 4
      %s165 = scalar_lea.vmem %s0, %s164
      %p166 = scmp.lt.s32.totalorder %s14, 1
      %s167 = scalar_select %p166, %s14, 1
      %s168 = smul.addr %s167, 3
      %s169 = smul.addr %s168, 8
      %s170 = scalar_lea.vmem %s3, %s169
      %v171 = vld [vmem:[%s165] sm:$0xff]
      %v172 = vld [vmem:[%s165 + $0x8] sm:$0xf]
      %v175 = vcombine.high %v171, %v171
      %177 = vst [vmem:[#allocation2] sm:$0xf] %v171
      %178 = vst [vmem:[#allocation2 + $0x8] sm:$0xf] %v175
      %vm179 = vcmask 257024
      %180 = vst.msk [vmem:[#allocation2 + $0x10] sm:$0xf] %vm179, %v172
      %v181 = vcombine.low %v171, %v171
      %v182 = vcombine.low %v172, %v172
      %183 = vrot.lane.b32.xlu0 %v181, 127
      %v184 = vpop.permute.xlu0 %183
      %185 = vrot.lane.b32.xlu0 %v171, 127
      %v186 = vpop.permute.xlu0 %185
      %187 = vrot.lane.b32.xlu0 %v182, 127
      %v188 = vpop.permute.xlu0 %187
      %vm189 = vcmask 1039360
      %v190 = vsel %vm189, %v184, %v186
      %v191 = vsel %vm189, %v186, %v188
      %195 = vst [vmem:[#allocation2] sm:$0xf0] %v190
      %196 = vst [vmem:[#allocation2 + $0x8] sm:$0xf0] %v191
      %vm197 = vcmask 261124
      %198 = vst.msk [vmem:[#allocation2 + $0x10] sm:$0xf0] %vm197, %v188
      %199 = vrot.lane.b32.xlu0 %v171, 126
      %v200 = vpop.permute.xlu0 %199
      %201 = vrot.lane.b32.xlu0 %v175, 126
      %v202 = vpop.permute.xlu0 %201
      %203 = vrot.lane.b32.xlu0 %v172, 126
      %v204 = vpop.permute.xlu0 %203
      %vm205 = vcmask 1031168
      %v206 = vsel %vm205, %v200, %v202
      %v207 = vsel %vm205, %v202, %v204
      %211 = vst [vmem:[#allocation2 + $0x18] sm:$0xf] %v206
      %212 = vst [vmem:[#allocation2 + $0x20] sm:$0xf] %v207
      %213 = vst.msk [vmem:[#allocation2 + $0x28] sm:$0xf] %vm179, %v204
      %214 = vrot.lane.b32.xlu0 %v181, 110
      %v215 = vpop.permute.xlu0 %214
      %216 = vrot.lane.b32.xlu0 %v171, 110
      %v217 = vpop.permute.xlu0 %216
      %218 = vrot.lane.b32.xlu0 %v182, 110
      %v219 = vpop.permute.xlu0 %218
      %vm220 = vcmask 900096
      %v221 = vsel %vm220, %v215, %v217
      %v222 = vsel %vm220, %v217, %v219
      %226 = vst [vmem:[#allocation2 + $0x18] sm:$0xf0] %v221
      %227 = vst [vmem:[#allocation2 + $0x20] sm:$0xf0] %v222
      %228 = vst.msk [vmem:[#allocation2 + $0x28] sm:$0xf0] %vm197, %v219
      %229 = vrot.lane.b32.xlu0 %v171, 109
      %v230 = vpop.permute.xlu0 %229
      %231 = vrot.lane.b32.xlu0 %v175, 109
      %v232 = vpop.permute.xlu0 %231
      %233 = vrot.lane.b32.xlu0 %v172, 109
      %v234 = vpop.permute.xlu0 %233
      %vm235 = vcmask 891904
      %v236 = vsel %vm235, %v230, %v232
      %v237 = vsel %vm235, %v232, %v234
      %241 = vst [vmem:[#allocation2 + $0x30] sm:$0xf] %v236
      %242 = vst [vmem:[#allocation2 + $0x38] sm:$0xf] %v237
      %243 = vst.msk [vmem:[#allocation2 + $0x40] sm:$0xf] %vm179, %v234
      %244 = vrot.lane.b32.xlu0 %v181, 108
      %v245 = vpop.permute.xlu0 %244
      %246 = vrot.lane.b32.xlu0 %v171, 108
      %v247 = vpop.permute.xlu0 %246
      %248 = vrot.lane.b32.xlu0 %v182, 108
      %v249 = vpop.permute.xlu0 %248
      %vm250 = vcmask 883712
      %v251 = vsel %vm250, %v245, %v247
      %v252 = vsel %vm250, %v247, %v249
      %256 = vst [vmem:[#allocation2 + $0x30] sm:$0xf0] %v251
      %257 = vst [vmem:[#allocation2 + $0x38] sm:$0xf0] %v252
      %258 = vst.msk [vmem:[#allocation2 + $0x40] sm:$0xf0] %vm197, %v249
      %259 = vrot.lane.b32.xlu0 %v171, 92
      %v260 = vpop.permute.xlu0 %259
      %261 = vrot.lane.b32.xlu0 %v175, 92
      %v262 = vpop.permute.xlu0 %261
      %263 = vrot.lane.b32.xlu0 %v172, 92
      %v264 = vpop.permute.xlu0 %263
      %vm265 = vcmask 752640
      %v266 = vsel %vm265, %v260, %v262
      %v267 = vsel %vm265, %v262, %v264
      %271 = vst [vmem:[#allocation2 + $0x48] sm:$0xf] %v266
      %272 = vst [vmem:[#allocation2 + $0x50] sm:$0xf] %v267
      %273 = vst.msk [vmem:[#allocation2 + $0x58] sm:$0xf] %vm179, %v264
      %274 = vrot.lane.b32.xlu0 %v181, 91
      %v275 = vpop.permute.xlu0 %274
      %276 = vrot.lane.b32.xlu0 %v171, 91
      %v277 = vpop.permute.xlu0 %276
      %278 = vrot.lane.b32.xlu0 %v182, 91
      %v279 = vpop.permute.xlu0 %278
      %vm280 = vcmask 744448
      %v281 = vsel %vm280, %v275, %v277
      %v282 = vsel %vm280, %v277, %v279
      %286 = vst [vmem:[#allocation2 + $0x48] sm:$0xf0] %v281
      %287 = vst [vmem:[#allocation2 + $0x50] sm:$0xf0] %v282
      %288 = vst.msk [vmem:[#allocation2 + $0x58] sm:$0xf0] %vm197, %v279
      %289 = vrot.lane.b32.xlu0 %v171, 90
      %v290 = vpop.permute.xlu0 %289
      %291 = vrot.lane.b32.xlu0 %v175, 90
      %v292 = vpop.permute.xlu0 %291
      %293 = vrot.lane.b32.xlu0 %v172, 90
      %v294 = vpop.permute.xlu0 %293
      %vm295 = vcmask 736256
      %v296 = vsel %vm295, %v290, %v292
      %v297 = vsel %vm295, %v292, %v294
      %301 = vst [vmem:[#allocation2 + $0x60] sm:$0xf] %v296
      %302 = vst [vmem:[#allocation2 + $0x68] sm:$0xf] %v297
      %303 = vst.msk [vmem:[#allocation2 + $0x70] sm:$0xf] %vm179, %v294
      %v304 = vld [vmem:[%s1] sm:$0xff]
      %v305 = vld [vmem:[%s1 + $0x8] sm:$0xff]
      %v306 = vld [vmem:[#allocation2] sm:$0xff]
      %v307 = vld [vmem:[#allocation2 + $0x8] sm:$0xff]
      %v308 = vld [vmem:[#allocation2 + $0x10] sm:$0xff]
      %v309 = vld [vmem:[#allocation2 + $0x18] sm:$0xff]
      %v310 = vld [vmem:[#allocation2 + $0x20] sm:$0xff]
      %v311 = vld [vmem:[#allocation2 + $0x28] sm:$0xff]
      %v312 = vld [vmem:[#allocation2 + $0x30] sm:$0xff]
      %v313 = vld [vmem:[#allocation2 + $0x38] sm:$0xff]
      %v314 = vld [vmem:[#allocation2 + $0x40] sm:$0xff]
      %v315 = vld [vmem:[#allocation2 + $0x48] sm:$0xff]
      %v316 = vld [vmem:[#allocation2 + $0x50] sm:$0xff]
      %v317 = vld [vmem:[#allocation2 + $0x58] sm:$0xff]
      %v318 = vld [vmem:[#allocation2 + $0x60] sm:$0xf]
      %v319 = vld [vmem:[#allocation2 + $0x68] sm:$0xf]
      %v320 = vld [vmem:[#allocation2 + $0x70] sm:$0xf]
      %v321 = vld [vmem:[%s2] sm:$0xff]
      %v322 = vld [vmem:[%s2 + $0x8] sm:$0xff]
      %324 = vset.pattern.permute.xlu0 0
      %325 = vperm.xlu0 %324, %v321
      %v326 = vpop.permute.xlu0 %325
      %329 = vset.pattern.permute.xlu0 0
      %330 = vperm.xlu0 %329, %v322
      %v331 = vpop.permute.xlu0 %330
      %vm333 = vcmask 293888
      %v335 = vsel %vm333, %v304, 0
      %v338 = vsel %vm333, %v305, 0
      %vm340 = vcmask 1043456
      %v342 = vsel %vm340, %v318, 0
      %v345 = vsel %vm340, %v319, 0
      %v348 = vsel %vm340, %v320, 0
      %350 = vmatprep.subr.mxu0 %v307
      %351 = vmatpush1.msra.mxu0 %v306
      %352 = vmatprep.subr.mxu0 %v310
      %353 = vmatpush1.msra.mxu0 %v309
      %354 = vmatprep.subr.mxu0 %v313
      %355 = vmatpush1.msra.mxu0 %v312
      %356 = vmatprep.subr.mxu0 %v316
      %357 = vmatpush1.msra.mxu0 %v315
      %358 = vmatprep.subr.mxu0 %v345
      %359 = vmatpush1.msra.mxu0 %v342
      %360 = vmatprep.subr.mxu0 0.0
      %361 = vmatpush1.msra.mxu0 0.0
      %362 = vmatprep.subr.mxu0 0.0
      %363 = vmatpush1.msra.mxu0 0.0
      %364 = vmatprep.subr.mxu0 0.0
      %365 = vmatpush1.msra.mxu0 0.0
      %366 = vmatprep.subr.mxu0 0.0
      %367 = vmatpush1.msra.mxu0 0.0
      %368 = vmatprep.subr.mxu0 0.0
      %369 = vmatpush1.msra.mxu0 0.0
      %370 = vmatprep.subr.mxu0 0.0
      %371 = vmatpush1.msra.mxu0 0.0
      %372 = vmatprep.subr.mxu0 0.0
      %373 = vmatpush1.msra.mxu0 0.0
      %374 = vmatprep.subr.mxu0 0.0
      %375 = vmatpush1.msra.mxu0 0.0
      %376 = vmatprep.subr.mxu0 0.0
      %377 = vmatpush1.msra.mxu0 0.0
      %378 = vmatprep.subr.mxu0 0.0
      %379 = vmatpush1.msra.mxu0 0.0
      %380 = vmatprep.subr.mxu0 0.0
      %381 = vmatpush1.msra.mxu0 0.0
      %382 = vmatprep.subr.mxu0 0.0
      %383 = vmatpush1.msra.mxu0 0.0
      %384 = vmatprep.subr.mxu0 0.0
      %385 = vmatpush1.msra.mxu0 0.0
      %386 = vmatprep.subr.mxu0 0.0
      %387 = vmatpush1.msra.mxu0 0.0
      %388 = vmatprep.subr.mxu0 0.0
      %389 = vmatpush1.msra.mxu0 0.0
      %390 = vmatprep.subr.mxu0 0.0
      %391 = vmatpush1.msra.mxu0 0.0
      %392 = vmatprep.subr.mxu0 0.0
      %393 = vmatpush1.msra.mxu0 0.0
      %394 = vmatprep.subr.mxu0 0.0
      %395 = vmatpush1.msra.mxu0 0.0
      %396 = vmatprep.subr.mxu0 0.0
      %397 = vmatpush1.msra.mxu0 0.0
      %398 = vmatprep.subr.mxu0 0.0
      %399 = vmatpush1.msra.mxu0 0.0
      %400 = vmatprep.subr.mxu0 0.0
      %401 = vmatpush1.msra.mxu0 0.0
      %402 = vmatprep.subr.mxu0 0.0
      %403 = vmatpush1.msra.mxu0 0.0
      %404 = vmatprep.subr.mxu0 0.0
      %405 = vmatpush1.msra.mxu0 0.0
      %406 = vmatprep.subr.mxu0 0.0
      %407 = vmatpush1.msra.mxu0 0.0
      %408 = vmatprep.subr.mxu0 0.0
      %409 = vmatpush1.msra.mxu0 0.0
      %410 = vmatprep.subr.mxu0 0.0
      %411 = vmatpush1.msra.mxu0 0.0
      %412 = vmatprep.subr.mxu0 0.0
      %413 = vmatpush1.msra.mxu0 0.0
      %414 = vmatprep.mubr.f32.mxu0 0.0
      %415 = vmatmul.mubr.f32.gmra.mrb[0].mxu0 %v335
      %v416 = vpop.f32.mrb[0].mxu0
      %v417 = vadd.f32 %v326, %v416
      %v418 = vpop.f32.mrb[0].mxu0
      %v419 = vadd.f32 %v326, %v418
      %420 = vmatprep.mubr.f32.mxu0 0.0
      %421 = vmatmul.mubr.f32.gmra.mrb[0].mxu0 %v338
      %v422 = vpop.f32.mrb[0].mxu0
      %v423 = vadd.f32 %v331, %v422
      %v424 = vpop.f32.mrb[0].mxu0
      %v425 = vadd.f32 %v331, %v424
      %426 = vdwg.mxu0
      %427 = vmatprep.subr.mxu0 0.0
      %428 = vmatpush1.msra.mxu0 %v308
      %429 = vmatprep.subr.mxu0 0.0
      %430 = vmatpush1.msra.mxu0 %v311
      %431 = vmatprep.subr.mxu0 0.0
      %432 = vmatpush1.msra.mxu0 %v314
      %433 = vmatprep.subr.mxu0 0.0
      %434 = vmatpush1.msra.mxu0 %v317
      %435 = vmatprep.subr.mxu0 0.0
      %436 = vmatpush1.msra.mxu0 %v348
      %437 = vmatprep.subr.mxu0 0.0
      %438 = vmatpush1.msra.mxu0 0.0
      %439 = vmatprep.subr.mxu0 0.0
      %440 = vmatpush1.msra.mxu0 0.0
      %441 = vmatprep.subr.mxu0 0.0
      %442 = vmatpush1.msra.mxu0 0.0
      %443 = vmatprep.subr.mxu0 0.0
      %444 = vmatpush1.msra.mxu0 0.0
      %445 = vmatprep.subr.mxu0 0.0
      %446 = vmatpush1.msra.mxu0 0.0
      %447 = vmatprep.subr.mxu0 0.0
      %448 = vmatpush1.msra.mxu0 0.0
      %449 = vmatprep.subr.mxu0 0.0
      %450 = vmatpush1.msra.mxu0 0.0
      %451 = vmatprep.subr.mxu0 0.0
      %452 = vmatpush1.msra.mxu0 0.0
      %453 = vmatprep.subr.mxu0 0.0
      %454 = vmatpush1.msra.mxu0 0.0
      %455 = vmatprep.subr.mxu0 0.0
      %456 = vmatpush1.msra.mxu0 0.0
      %457 = vmatprep.subr.mxu0 0.0
      %458 = vmatpush1.msra.mxu0 0.0
      %459 = vmatprep.subr.mxu0 0.0
      %460 = vmatpush1.msra.mxu0 0.0
      %461 = vmatprep.subr.mxu0 0.0
      %462 = vmatpush1.msra.mxu0 0.0
      %463 = vmatprep.subr.mxu0 0.0
      %464 = vmatpush1.msra.mxu0 0.0
      %465 = vmatprep.subr.mxu0 0.0
      %466 = vmatpush1.msra.mxu0 0.0
      %467 = vmatprep.subr.mxu0 0.0
      %468 = vmatpush1.msra.mxu0 0.0
      %469 = vmatprep.subr.mxu0 0.0
      %470 = vmatpush1.msra.mxu0 0.0
      %471 = vmatprep.subr.mxu0 0.0
      %472 = vmatpush1.msra.mxu0 0.0
      %473 = vmatprep.subr.mxu0 0.0
      %474 = vmatpush1.msra.mxu0 0.0
      %475 = vmatprep.subr.mxu0 0.0
      %476 = vmatpush1.msra.mxu0 0.0
      %477 = vmatprep.subr.mxu0 0.0
      %478 = vmatpush1.msra.mxu0 0.0
      %479 = vmatprep.subr.mxu0 0.0
      %480 = vmatpush1.msra.mxu0 0.0
      %481 = vmatprep.subr.mxu0 0.0
      %482 = vmatpush1.msra.mxu0 0.0
      %483 = vmatprep.subr.mxu0 0.0
      %484 = vmatpush1.msra.mxu0 0.0
      %485 = vmatprep.subr.mxu0 0.0
      %486 = vmatpush1.msra.mxu0 0.0
      %487 = vmatprep.subr.mxu0 0.0
      %488 = vmatpush1.msra.mxu0 0.0
      %489 = vmatprep.subr.mxu0 0.0
      %490 = vmatpush1.msra.mxu0 0.0
      %491 = vmatprep.mubr.f32.mxu0 0.0
      %492 = vmatmul.mubr.f32.gmra.mrb[0].mxu0 %v335
      %v493 = vpop.f32.mrb[0].mxu0
      %v494 = vadd.f32 %v326, %v493
      %v495 = vpop.f32.mrb[0].mxu0
      %496 = vmatprep.mubr.f32.mxu0 0.0
      %497 = vmatmul.mubr.f32.gmra.mrb[0].mxu0 %v338
      %v498 = vpop.f32.mrb[0].mxu0
      %v499 = vadd.f32 %v331, %v498
      %v500 = vpop.f32.mrb[0].mxu0
      %501 = vdwg.mxu0
      %v502 = vxor.u32 %v423, 2147483648
      %v503 = vxor.u32 %v425, 2147483648
      %v504 = vxor.u32 %v499, 2147483648
      %v505 = vmul.f32 %v502, 1.442695
      %v506 = vpow.pop %v505
      %v507 = vmul.f32 %v503, 1.442695
      %v508 = vpow.pop %v507
      %v509 = vmul.f32 %v504, 1.442695
      %v510 = vpow.pop %v509
      %v511 = vadd.f32 %v506, 1.0
      %v512 = vadd.f32 %v508, 1.0
      %v513 = vadd.f32 %v510, 1.0
      %v514 = vrcp.pop %v511
      %v515 = vmul.f32 1.0, %v514
      %v516 = vrcp.pop %v512
      %v517 = vmul.f32 1.0, %v516
      %v518 = vrcp.pop %v513
      %v519 = vmul.f32 1.0, %v518
      %v520 = vmul.f32 %v417, %v515
      %v521 = vmul.f32 %v419, %v517
      %v522 = vmul.f32 %v494, %v519
      %523 = vst [vmem:[%s170] sm:$0xff] %v520
      %524 = vst [vmem:[%s170 + $0x8] sm:$0xff] %v521
      %vm525 = vcmask 261120
      %526 = vst.msk [vmem:[%s170 + $0x10] sm:$0xff] %vm525, %v522
      %p527 = scmp.lt.s32.totalorder %s14, 1
      %s528 = scalar_select %p527, %s14, 1
      %s529 = smul.addr %s528, 3
      %s530 = smul.addr %s529, 8
      %s531 = scalar_lea.vmem %s3, %s530
      // Predicated region
      $region33: #{gated_cnn_forward.1} parent=31 // pred_check
        %p532 = pneg %p100
      $region34: #{gated_cnn_forward.1} parent=31 // pred_check_branch
        %534 = sbr.rel (%p532) target = $region36
      $region35: #{gated_cnn_forward.1} parent=31 // pred_region
        _
      $region36: #{gated_cnn_forward.1} parent=31 // pred_fallthru
        _
    $region32: #{gated_cnn_forward.1} parent=5 // pred_fallthru
      _
    %p535 = scmp.le.s32.totalorder 2, %s9
    // Predicated region
    $region37: #{gated_cnn_forward.1} parent=5 // pred_check
      %p536 = pneg %p535
    $region38: #{gated_cnn_forward.1} parent=5 // pred_check_branch
      %538 = sbr.rel (%p536) target = $region40
    $region39: #{gated_cnn_forward.1} parent=5 // pred_region
      %s539 = ssub.s32 %s9, 2
      // Predicated region
      $region41: #{gated_cnn_forward.1} parent=39 // pred_check
        %p540 = pneg %p106
      $region42: #{gated_cnn_forward.1} parent=39 // pred_check_branch
        %542 = sbr.rel (%p540) target = $region44
      $region43: #{gated_cnn_forward.1} parent=39 // pred_region
        %p543 = scmp.lt.s32.totalorder %s15, 1
        %s544 = scalar_select %p543, %s15, 1
        %s545 = smul.addr %s544, 3
        %s546 = smul.addr %s545, 8
        %s547 = scalar_lea.vmem %s3, %s546
      $region44: #{gated_cnn_forward.1} parent=39 // pred_fallthru
        _
    $region40: #{gated_cnn_forward.1} parent=5 // pred_fallthru
      _
  $region6: #{gated_cnn_forward.1} parent=0 // loop_footer
    %s13 = sadd.s32 1, %s9
  $region7: #{gated_cnn_forward.1} parent=0 // loop_footer_branch
    %8 = sbr.rel target = $region3
  $region8: #{gated_cnn_forward.1} parent=0 // loop_exit
    _

</llo_original>
